<compile_context>
chip_gen: v7x
topology: tpu7x:2x2x1
jax: 0.10.0
libtpu: 0.0.40
codegen_flags: <defaults>
</compile_context>

<pallas_src>
import functools

import jax
import jax.numpy as jnp
from jax.experimental import pallas as pl
from jax.experimental.pallas import tpu as pltpu


_MAX_ROW_TILE = 1024  # 1024 rows x 128 lanes x f32 = 512 KiB/block; x2 inputs x2 bufs = 2 MiB VMEM


def _bce_masked_kernel(len_ref, x_ref, t_ref, out_ref, *, pos_weight, T, row_tile):
    """One (batch, row-tile) grid step of the masked BCE-with-logits numerator.

    len_ref: SMEM (B,) int32           -- sequence lengths (scalar prefetch)
    x_ref:   VMEM (1, row_tile, 128)   -- logits tile (lane-dense)
    t_ref:   VMEM (1, row_tile, 128)   -- targets tile
    out_ref: VMEM (1, 1, 8, 128) f32   -- per-tile partial sums (one vreg)
    """
    b = pl.program_id(0)
    i = pl.program_id(1)
    L = len_ref[b]

    # Flat position of every element within this batch row (single hoisted iota pair).
    row = jax.lax.broadcasted_iota(jnp.int32, (row_tile, 128), 0)
    lane = jax.lax.broadcasted_iota(jnp.int32, (row_tile, 128), 1)
    t_pos = i * (row_tile * 128) + row * 128 + lane

    xb = x_ref[0].astype(jnp.float32)   # (row_tile, 128); cast in-kernel (bf16 stays bf16 over DMA)
    yb = t_ref[0].astype(jnp.float32)

    mask = t_pos < L                    # sequence mask, fused via where (no 0/1 f32 mul)
    z = jnp.where(mask, xb, 0.0)        # x * mask
    y = jnp.where(mask, yb, 0.0)        # target * mask

    # Numerically-stable BCEWithLogits with pos_weight (PyTorch formula):
    #   (1 - y) * z + (1 + (pw - 1) * y) * (log(1 + exp(-|z|)) + relu(-z))
    pw = jnp.float32(pos_weight)
    log_weight = 1.0 + (pw - 1.0) * y
    softplus_neg = jnp.log(1.0 + jnp.exp(-jnp.abs(z))) + jnp.maximum(-z, 0.0)
    elem = (1.0 - y) * z + log_weight * softplus_neg

    # Drop lane padding beyond the real max_len T (those elements don't exist).
    elem = jnp.where(t_pos < T, elem, 0.0)

    # Reduce only across vregs (pure VPU adds) to an (8,128) partial; the single
    # cross-lane reduction happens once in the wrapper, off the critical path.
    out_ref[0, 0] = jnp.sum(elem.reshape(row_tile // 8, 8, 128), axis=0)


def bce_loss_masked(x, target, length, *, pos_weight=1.0):
    """Masked BCE-with-logits loss, matching BCELossMasked.forward."""
    # TODO(synk): pos_weight is handled as a static scalar; a per-class tensor
    # pos_weight (rare for this module) would need an extra broadcast operand.
    B, T = x.shape
    length = length.astype(jnp.int32)

    # Lane-dense layout: each length-T row becomes (rows_pad, 128) so every vreg
    # is fully populated even when T is small / not a multiple of 128.
    rows = pl.cdiv(T, 128)
    rows8 = ((rows + 7) // 8) * 8                  # sublane-aligned
    row_tile = min(_MAX_ROW_TILE, rows8)           # multiple of 8 by construction
    grid_t = pl.cdiv(rows8, row_tile)
    rows_pad = grid_t * row_tile
    T_pad = rows_pad * 128

    def lane_dense(a):
        a = jnp.pad(a, ((0, 0), (0, T_pad - T)))
        return a.reshape(B, rows_pad, 128)

    x3 = lane_dense(x)
    t3 = lane_dense(target)

    kernel = functools.partial(
        _bce_masked_kernel, pos_weight=float(pos_weight), T=T, row_tile=row_tile
    )

    partials = pl.pallas_call(
        kernel,
        out_shape=jax.ShapeDtypeStruct((B, grid_t, 8, 128), jnp.float32),
        grid_spec=pltpu.PrefetchScalarGridSpec(
            num_scalar_prefetch=1,                  # length -> SMEM
            grid=(B, grid_t),
            in_specs=[
                pl.BlockSpec((1, row_tile, 128), lambda b, i, lens: (b, i, 0)),
                pl.BlockSpec((1, row_tile, 128), lambda b, i, lens: (b, i, 0)),
            ],
            out_specs=pl.BlockSpec((1, 1, 8, 128), lambda b, i, lens: (b, i, 0, 0)),
        ),
        compiler_params=pltpu.CompilerParams(
            # No cross-step state: both grid axes parallel (uses both TCs on v7x).
            dimension_semantics=("parallel", "parallel"),
            vmem_limit_bytes=32 * 1024 * 1024,
        ),
    )(length, x3, t3)

    numer = jnp.sum(partials)                                        # tiny final reduce
    denom = jnp.sum(jnp.clip(length, 0, T).astype(jnp.float32))      # == mask.sum()
    return numer / denom


def _reference(x, target, length, pos_weight):
    """Pure-JAX mirror of the PyTorch forward."""
    B, T = x.shape
    mask = (jnp.arange(T)[None, :] < length[:, None]).astype(jnp.float32)
    z = x * mask
    y = target * mask
    pw = jnp.float32(pos_weight)
    log_weight = 1.0 + (pw - 1.0) * y
    loss = (1.0 - y) * z + log_weight * (
        jnp.log(1.0 + jnp.exp(-jnp.abs(z))) + jnp.maximum(-z, 0.0)
    )
    return jnp.sum(loss) / jnp.sum(mask)


if __name__ == "__main__":
    key = jax.random.PRNGKey(0)
    B, T = 4, 300
    kx, kt = jax.random.split(key)
    x = jax.random.normal(kx, (B, T), dtype=jnp.float32)
    target = (jax.random.uniform(kt, (B, T)) > 0.5).astype(jnp.float32)
    length = jnp.array([300, 151, 87, 23], dtype=jnp.int32)
    pos_weight = 2.5

    out = bce_loss_masked(x, target, length, pos_weight=pos_weight)
    out = jax.block_until_ready(out)
    ref = _reference(x, target, length, pos_weight)

    if bool(jnp.allclose(out, ref, rtol=1e-4, atol=1e-5)):
        print("KERNEL_OK")
    else:
        print("MISMATCH", float(out), float(ref))
</pallas_src>

<mosaic_0001>
module attributes {stable_mosaic.version = 11 : i64} {
  func.func @_bce_masked_kernel(%arg0: i32, %arg1: i32, %arg2: memref<4xi32, #tpu.memory_space<smem>>, %arg3: memref<1x8x128xf32, #tpu.memory_space<vmem>>, %arg4: memref<1x8x128xf32, #tpu.memory_space<vmem>>, %arg5: memref<1x1x8x128xf32, #tpu.memory_space<vmem>>) attributes {dimension_semantics = [#tpu.dimension_semantics<parallel>, #tpu.dimension_semantics<parallel>], iteration_bounds = array<i64: 4, 1>, scalar_prefetch = 1 : i64, scratch_operands = 0 : i64, tpu.core_type = #tpu.core_type<tc>, window_params = [{transform_indices = @transform_0, window_bounds = array<i64: 1, 8, 128>}, {transform_indices = @transform_1, window_bounds = array<i64: 1, 8, 128>}, {transform_indices = @transform_2, window_bounds = array<i64: 1, 1, 8, 128>}]} {
    %0 = arith.index_cast %arg0 : i32 to index
    %1 = memref.load %arg2[%0] : memref<4xi32, #tpu.memory_space<smem>>
    %2 = tpu.iota {dimensions = array<i32: 0>} : vector<8x128xi32>
    %3 = tpu.iota {dimensions = array<i32: 1>} : vector<8x128xi32>
    %c1024_i32 = arith.constant 1024 : i32
    %4 = arith.muli %arg1, %c1024_i32 : i32
    %c128_i32 = arith.constant 128 : i32
    %5 = vector.broadcast %c128_i32 : i32 to vector<8x128xi32>
    %6 = arith.muli %2, %5 : vector<8x128xi32>
    %7 = vector.broadcast %4 : i32 to vector<8x128xi32>
    %8 = arith.addi %7, %6 : vector<8x128xi32>
    %9 = arith.addi %8, %3 : vector<8x128xi32>
    %c0 = arith.constant 0 : index
    %c0_0 = arith.constant 0 : index
    %c0_1 = arith.constant 0 : index
    %10 = vector.load %arg3[%c0, %c0_0, %c0_1] : memref<1x8x128xf32, #tpu.memory_space<vmem>>, vector<1x8x128xf32>
    %11 = vector.shape_cast %10 : vector<1x8x128xf32> to vector<8x128xf32>
    %c0_2 = arith.constant 0 : index
    %c0_3 = arith.constant 0 : index
    %c0_4 = arith.constant 0 : index
    %12 = vector.load %arg4[%c0_2, %c0_3, %c0_4] : memref<1x8x128xf32, #tpu.memory_space<vmem>>, vector<1x8x128xf32>
    %13 = vector.shape_cast %12 : vector<1x8x128xf32> to vector<8x128xf32>
    %14 = vector.broadcast %1 : i32 to vector<8x128xi32>
    %15 = arith.cmpi slt, %9, %14 : vector<8x128xi32>
    %cst = arith.constant 0.000000e+00 : f32
    %16 = vector.broadcast %cst : f32 to vector<8x128xf32>
    %17 = arith.select %15, %11, %16 : vector<8x128xi1>, vector<8x128xf32>
    %cst_5 = arith.constant 0.000000e+00 : f32
    %18 = vector.broadcast %cst_5 : f32 to vector<8x128xf32>
    %19 = arith.select %15, %13, %18 : vector<8x128xi1>, vector<8x128xf32>
    %cst_6 = arith.constant 2.500000e+00 : f32
    %cst_7 = arith.constant 1.000000e+00 : f32
    %20 = arith.subf %cst_6, %cst_7 : f32
    %21 = vector.broadcast %20 : f32 to vector<8x128xf32>
    %22 = arith.mulf %21, %19 : vector<8x128xf32>
    %cst_8 = arith.constant 1.000000e+00 : f32
    %23 = vector.broadcast %cst_8 : f32 to vector<8x128xf32>
    %24 = arith.addf %23, %22 : vector<8x128xf32>
    %25 = math.absf %17 : vector<8x128xf32>
    %cst_9 = arith.constant 0.000000e+00 : f32
    %26 = vector.broadcast %cst_9 : f32 to vector<8x128xf32>
    %27 = arith.subf %26, %25 : vector<8x128xf32>
    %28 = math.exp %27 : vector<8x128xf32>
    %cst_10 = arith.constant 1.000000e+00 : f32
    %29 = vector.broadcast %cst_10 : f32 to vector<8x128xf32>
    %30 = arith.addf %29, %28 : vector<8x128xf32>
    %31 = math.log %30 : vector<8x128xf32>
    %cst_11 = arith.constant 0.000000e+00 : f32
    %32 = vector.broadcast %cst_11 : f32 to vector<8x128xf32>
    %33 = arith.subf %32, %17 : vector<8x128xf32>
    %cst_12 = arith.constant 0.000000e+00 : f32
    %34 = vector.broadcast %cst_12 : f32 to vector<8x128xf32>
    %35 = arith.maximumf %33, %34 : vector<8x128xf32>
    %36 = arith.addf %31, %35 : vector<8x128xf32>
    %cst_13 = arith.constant 1.000000e+00 : f32
    %37 = vector.broadcast %cst_13 : f32 to vector<8x128xf32>
    %38 = arith.subf %37, %19 : vector<8x128xf32>
    %39 = arith.mulf %38, %17 : vector<8x128xf32>
    %40 = arith.mulf %24, %36 : vector<8x128xf32>
    %41 = arith.addf %39, %40 : vector<8x128xf32>
    %c300_i32 = arith.constant 300 : i32
    %42 = vector.broadcast %c300_i32 : i32 to vector<8x128xi32>
    %43 = arith.cmpi slt, %9, %42 : vector<8x128xi32>
    %cst_14 = arith.constant 0.000000e+00 : f32
    %44 = vector.broadcast %cst_14 : f32 to vector<8x128xf32>
    %45 = arith.select %43, %41, %44 : vector<8x128xi1>, vector<8x128xf32>
    %46 = vector.shape_cast %45 : vector<8x128xf32> to vector<1x8x128xf32>
    %cst_15 = arith.constant dense<0.000000e+00> : vector<8x128xf32>
    %47 = vector.multi_reduction <add>, %46, %cst_15 [0] : vector<1x8x128xf32> to vector<8x128xf32>
    %c0_16 = arith.constant 0 : index
    %c0_17 = arith.constant 0 : index
    %c0_18 = arith.constant 0 : index
    %c0_19 = arith.constant 0 : index
    %48 = vector.load %arg5[%c0_16, %c0_17, %c0_18, %c0_19] : memref<1x1x8x128xf32, #tpu.memory_space<vmem>>, vector<1x1x8x128xf32>
    %49 = vector.shape_cast %48 : vector<1x1x8x128xf32> to vector<8x128xf32>
    %50 = vector.shape_cast %47 : vector<8x128xf32> to vector<1x1x8x128xf32>
    tpu.vector_store %arg5[%c0_16, %c0_17, %c0_18, %c0_19], %50 {strides = array<i32>} : memref<1x1x8x128xf32, #tpu.memory_space<vmem>>, vector<1x1x8x128xf32>,
    return
  }
  func.func @transform_0(%arg0: i32, %arg1: i32, %arg2: memref<4xi32, #tpu.memory_space<smem>>) -> (i32, i32, i32) {
    %c0_i32 = arith.constant 0 : i32
    %c0_i32_0 = arith.constant 0 : i32
    return %arg0, %arg1, %c0_i32 : i32, i32, i32
  }
  func.func @transform_1(%arg0: i32, %arg1: i32, %arg2: memref<4xi32, #tpu.memory_space<smem>>) -> (i32, i32, i32) {
    %c0_i32 = arith.constant 0 : i32
    %c0_i32_0 = arith.constant 0 : i32
    return %arg0, %arg1, %c0_i32 : i32, i32, i32
  }
  func.func @transform_2(%arg0: i32, %arg1: i32, %arg2: memref<4xi32, #tpu.memory_space<smem>>) -> (i32, i32, i32, i32) {
    %c0_i32 = arith.constant 0 : i32
    %c0_i32_0 = arith.constant 0 : i32
    %c0_i32_1 = arith.constant 0 : i32
    return %arg0, %arg1, %c0_i32, %c0_i32_0 : i32, i32, i32, i32
  }
}

</mosaic_0001>

<llo_original>
// kernel: tpu_custom_call.1
$region0: #{tpu_custom_call.1}
  #allocation0 [shape = 'u32[]', space=smem, size = 0x4, offset = 0x4, fixed_abs, tag = 'smem constant byte address 0x4 - core index']
  #allocation1 [shape = 'u32[144,128]{1,0:T(1,128)}', space=vmem, size = 0x12000, scoped, tag = 'internal scratch']
  #allocation2 [shape = 's32[1]{0}', space=sflag, size = 0x4, scoped, tag = 'scoped memory for tpu_custom_call.1']
  #allocation3 [shape = 'u8[512]{0}', space=smem, size = 0x200, scoped, tag = 'prefetched SMEM operand 0']
  %s0 = inlined_call_operand.hbm [shape: s32[4], index: 0, kind: input, shape index: {}]
  %s1 = inlined_call_operand.hbm [shape: f32[4,8,128], index: 1, kind: input, shape index: {}]
  %s2 = inlined_call_operand.hbm [shape: f32[4,8,128], index: 2, kind: input, shape index: {}]
  %s3 = inlined_call_operand.hbm [shape: f32[4,1,8,128], index: 3, kind: output, shape index: {}]
  %s4 = sld [smem:[#allocation0]]
  $region49: #{tpu_custom_call.1} parent=0
    _
  %s6 = ssub.s32 1, %s4
  %s7 = scalar_select 0, %s6, %s4
  %9 = dma.hbm_to_smem %s0, 16, [#allocation3], [#allocation2]
  %10 = dma.done [#allocation2], 16
  %11 = sfence
  $region1: #{tpu_custom_call.1} parent=0
    #allocation4 [shape = 'u8[8192]{0}', space=vmem, size = 0x2000, scoped, tag = 'input window, operand 1']
    #allocation5 [shape = 's32[2]{0}', space=sflag, size = 0x8, scoped, tag = 'scoped memory for tpu_custom_call.1']
    #allocation6 [shape = 's32[2]{0}', space=sflag, size = 0x8, scoped, tag = 'scoped memory for tpu_custom_call.1']
    #allocation7 [shape = 'u8[8192]{0}', space=vmem, size = 0x2000, scoped, tag = 'input window, operand 2']
    #allocation8 [shape = 's32[2]{0}', space=sflag, size = 0x8, scoped, tag = 'scoped memory for tpu_custom_call.1']
    #allocation9 [shape = 'u8[8192]{0}', space=vmem, size = 0x2000, scoped, tag = 'output window, operand 0']
    %12 = vsyncpa [#allocation5], 0
    %s13 = scalar_lea.sflag [#allocation5], 1
    %14 = vsyncpa %s13, 0
    %15 = vsyncpa [#allocation8], 0
    %s16 = scalar_lea.sflag [#allocation8], 1
    %17 = vsyncpa %s16, 0
    %18 = vsyncpa [#allocation6], 0
    %s19 = scalar_lea.sflag [#allocation6], 1
    %20 = vsyncpa %s19, 0
    loop: start=0, step=1, limit=6
    $region2: #{tpu_custom_call.1} parent=1 // loop_pre_header
      _
    $region3: #{tpu_custom_call.1} parent=1 // loop_header
      %s22 = sphi 0, %s26
      %p23 = scmp.ge.s32.totalorder %s22, 6
      %s29 = sphi 0, %s41
      %s30 = sphi 0, %s37
      %s31 = sphi 0, %s29
      %s32 = sphi 0, %s30
      %s33 = sphi 0, %s31
      %s34 = sphi 0, %s32
      %s46 = sphi 0, %s48
      %s49 = sphi 0, %s46
      %s50 = sphi 0, %s49
      %s66 = sphi 0, %s50
      %s74 = sphi 0, %s76
      %s77 = sphi 0, %s74
      %s78 = sphi 0, %s77
      %s94 = sphi 0, %s78
      %s102 = sphi 0, %s104
      %s105 = sphi 0, %s102
      %s106 = sphi 0, %s105
      %s122 = sphi 0, %s106
    $region4: #{tpu_custom_call.1} parent=1 // loop_header_branch
      %25 = sbr.rel (%p23) target = $region8
    $region5: #{tpu_custom_call.1} parent=1 // loop_body
      %s27 = ssub.s32 %s22, 1
      %s28 = ssub.s32 %s22, 2
      %s35 = sadd.s32 1, %s30
      %p36 = scmp.ge.s32.totalorder %s35, 1
      %s37 = scalar_select %p36, 0, %s35
      %s38 = sadd.s32 1, %s29
      %s39 = scalar_select %p36, %s38, %s29
      %p40 = scmp.ge.s32.totalorder %s39, 4
      %s41 = scalar_select %p40, 0, %s39
      %s42 = ssub.s32 %s29, %s41
      %s43 = ssub.s32 %s30, %s37
      %s44 = sor.u32 %s42, %s43
      %p45 = scmp.eq.s32.totalorder %s44, 0
      %s47 = sadd.s32 %s46, 1
      %s48 = scalar_select %p45, %s46, %s47
      %p51 = pneg %p45
      %p52 = scmp.eq.s32.totalorder %s22, 3
      %p53 = por %p51, %p52
      %p54 = scmp.ne.s32.totalorder %s46, %s49
      %p55 = scmp.eq.s32.totalorder %s22, 0
      %p56 = por %p54, %p55
      %p57 = scmp.ne.s32.totalorder %s46, %s49
      %p58 = scmp.eq.s32.totalorder %s27, 3
      %p59 = por %p57, %p58
      %p60 = scmp.ne.s32.totalorder %s49, %s50
      %p61 = scmp.eq.s32.totalorder %s27, 0
      %p62 = por %p60, %p61
      %p63 = scmp.ne.s32.totalorder %s49, %s50
      %p64 = scmp.eq.s32.totalorder %s28, 3
      %p65 = por %p63, %p64
      %p67 = scmp.ne.s32.totalorder %s50, %s66
      %p68 = scmp.eq.s32.totalorder %s28, 0
      %p69 = por %p67, %p68
      %s70 = ssub.s32 %s29, %s41
      %s71 = ssub.s32 %s30, %s37
      %s72 = sor.u32 %s70, %s71
      %p73 = scmp.eq.s32.totalorder %s72, 0
      %s75 = sadd.s32 %s74, 1
      %s76 = scalar_select %p73, %s74, %s75
      %p79 = pneg %p73
      %p80 = scmp.eq.s32.totalorder %s22, 3
      %p81 = por %p79, %p80
      %p82 = scmp.ne.s32.totalorder %s74, %s77
      %p83 = scmp.eq.s32.totalorder %s22, 0
      %p84 = por %p82, %p83
      %p85 = scmp.ne.s32.totalorder %s74, %s77
      %p86 = scmp.eq.s32.totalorder %s27, 3
      %p87 = por %p85, %p86
      %p88 = scmp.ne.s32.totalorder %s77, %s78
      %p89 = scmp.eq.s32.totalorder %s27, 0
      %p90 = por %p88, %p89
      %p91 = scmp.ne.s32.totalorder %s77, %s78
      %p92 = scmp.eq.s32.totalorder %s28, 3
      %p93 = por %p91, %p92
      %p95 = scmp.ne.s32.totalorder %s78, %s94
      %p96 = scmp.eq.s32.totalorder %s28, 0
      %p97 = por %p95, %p96
      %s98 = ssub.s32 %s29, %s41
      %s99 = ssub.s32 %s30, %s37
      %s100 = sor.u32 %s98, %s99
      %p101 = scmp.eq.s32.totalorder %s100, 0
      %s103 = sadd.s32 %s102, 1
      %s104 = scalar_select %p101, %s102, %s103
      %p107 = pneg %p101
      %p108 = scmp.eq.s32.totalorder %s22, 3
      %p109 = por %p107, %p108
      %p110 = scmp.ne.s32.totalorder %s102, %s105
      %p111 = scmp.eq.s32.totalorder %s22, 0
      %p112 = por %p110, %p111
      %p113 = scmp.ne.s32.totalorder %s102, %s105
      %p114 = scmp.eq.s32.totalorder %s27, 3
      %p115 = por %p113, %p114
      %p116 = scmp.ne.s32.totalorder %s105, %s106
      %p117 = scmp.eq.s32.totalorder %s27, 0
      %p118 = por %p116, %p117
      %p119 = scmp.ne.s32.totalorder %s105, %s106
      %p120 = scmp.eq.s32.totalorder %s28, 3
      %p121 = por %p119, %p120
      %p123 = scmp.ne.s32.totalorder %s106, %s122
      %p124 = scmp.eq.s32.totalorder %s28, 0
      %p125 = por %p123, %p124
      %p126 = scmp.le.s32.totalorder 1, %s22
      %p127 = scmp.lt.s32.totalorder %s22, 5
      %p128 = pnand %p126, %p127
      %p129 = pneg %p128
      // Predicated region
      $region9: #{tpu_custom_call.1} parent=5 // pred_check
        _
      $region10: #{tpu_custom_call.1} parent=5 // pred_check_branch
        %131 = sbr.rel (%p128) target = $region12
      $region11: #{tpu_custom_call.1} parent=5 // pred_region
        %s132 = ssub.s32 %s22, 1
      $region12: #{tpu_custom_call.1} parent=5 // pred_fallthru
        _
      %p133 = scmp.lt.s32.totalorder %s22, 4
      // Predicated region
      $region13: #{tpu_custom_call.1} parent=5 // pred_check
        %p134 = pneg %p133
      $region14: #{tpu_custom_call.1} parent=5 // pred_check_branch
        %136 = sbr.rel (%p134) target = $region16
      $region15: #{tpu_custom_call.1} parent=5 // pred_region
        // Predicated region
        $region17: #{tpu_custom_call.1} parent=15 // pred_check
          %p137 = pneg %p56
        $region18: #{tpu_custom_call.1} parent=15 // pred_check_branch
          %139 = sbr.rel (%p137) target = $region20
        $region19: #{tpu_custom_call.1} parent=15 // pred_region
          %s140 = sand.u32 %s46, 1
          %s141 = scalar_lea.sflag [#allocation5], %s140
          %s142 = sand.u32 %s46, 1
          %s143 = smul.addr %s142, 8
          %s144 = scalar_lea.vmem [#allocation4], %s143
          %s146 = ssub.s32 128, 128
          %147 = vsyncadd %s141, %s146
          %s148 = sadd.s32 %s30, %s29
          %s149 = smul.addr %s148, 128
          %s150 = scalar_lea.hbm %s1, %s149
          %s152 = sshll.u32 %s144, 4
          %s153 = int_to_ptr.vmem [resolvable:$true] %s152
          %155 = dma.hbm_to_vmem [thread:$0]  %s150, 128, %s153, %s141
        $region20: #{tpu_custom_call.1} parent=15 // pred_fallthru
          _
        // Predicated region
        $region21: #{tpu_custom_call.1} parent=15 // pred_check
          %p156 = pneg %p84
        $region22: #{tpu_custom_call.1} parent=15 // pred_check_branch
          %158 = sbr.rel (%p156) target = $region24
        $region23: #{tpu_custom_call.1} parent=15 // pred_region
          %s159 = sand.u32 %s74, 1
          %s160 = scalar_lea.sflag [#allocation8], %s159
          %s161 = sand.u32 %s74, 1
          %s162 = smul.addr %s161, 8
          %s163 = scalar_lea.vmem [#allocation7], %s162
          %s165 = ssub.s32 128, 128
          %166 = vsyncadd %s160, %s165
          %s167 = sadd.s32 %s30, %s29
          %s168 = smul.addr %s167, 128
          %s169 = scalar_lea.hbm %s2, %s168
          %s171 = sshll.u32 %s163, 4
          %s172 = int_to_ptr.vmem [resolvable:$true] %s171
          %174 = dma.hbm_to_vmem [thread:$0]  %s169, 128, %s172, %s160
        $region24: #{tpu_custom_call.1} parent=15 // pred_fallthru
          _
      $region16: #{tpu_custom_call.1} parent=5 // pred_fallthru
        _
      %p175 = scmp.le.s32.totalorder 1, %s22
      %p176 = scmp.lt.s32.totalorder %s22, 5
      %p177 = pnand %p175, %p176
      %p178 = pneg %p177
      // Predicated region
      $region25: #{tpu_custom_call.1} parent=5 // pred_check
        _
      $region26: #{tpu_custom_call.1} parent=5 // pred_check_branch
        %180 = sbr.rel (%p177) target = $region28
      $region27: #{tpu_custom_call.1} parent=5 // pred_region
        %s181 = ssub.s32 %s22, 1
        %s182 = sand.u32 %s49, 1
        %s183 = scalar_lea.sflag [#allocation5], %s182
        %s184 = sand.u32 %s49, 1
        %s185 = smul.addr %s184, 8
        %s186 = scalar_lea.vmem [#allocation4], %s185
        // Predicated region
        $region29: #{tpu_custom_call.1} parent=27 // pred_check
          %p187 = pneg %p62
        $region30: #{tpu_custom_call.1} parent=27 // pred_check_branch
          %189 = sbr.rel (%p187) target = $region32
        $region31: #{tpu_custom_call.1} parent=27 // pred_region
          %190 = dma.done %s183, 128
        $region32: #{tpu_custom_call.1} parent=27 // pred_fallthru
          _
        %s191 = sand.u32 %s77, 1
        %s192 = scalar_lea.sflag [#allocation8], %s191
        %s193 = sand.u32 %s77, 1
        %s194 = smul.addr %s193, 8
        %s195 = scalar_lea.vmem [#allocation7], %s194
        // Predicated region
        $region33: #{tpu_custom_call.1} parent=27 // pred_check
          %p196 = pneg %p90
        $region34: #{tpu_custom_call.1} parent=27 // pred_check_branch
          %198 = sbr.rel (%p196) target = $region36
        $region35: #{tpu_custom_call.1} parent=27 // pred_region
          %199 = dma.done %s192, 128
        $region36: #{tpu_custom_call.1} parent=27 // pred_fallthru
          _
        %s200 = sand.u32 %s49, 1
        %s201 = scalar_lea.sflag [#allocation5], %s200
        %s202 = sand.u32 %s49, 1
        %s203 = smul.addr %s202, 8
        %s204 = scalar_lea.vmem [#allocation4], %s203
        %p205 = pneg %p62
        %p206 = pneg %p59
        %s207 = sand.u32 %s77, 1
        %s208 = scalar_lea.sflag [#allocation8], %s207
        %s209 = sand.u32 %s77, 1
        %s210 = smul.addr %s209, 8
        %s211 = scalar_lea.vmem [#allocation7], %s210
        %p212 = pneg %p90
        %p213 = pneg %p87
        %p214 = pneg %p118
        %p215 = pneg %p115
        %s216 = sand.u32 %s105, 1
        %s217 = scalar_lea.sflag [#allocation6], %s216
        %s218 = sand.u32 %s105, 1
        %s219 = smul.addr %s218, 8
        %s220 = scalar_lea.vmem [#allocation9], %s219
        %s221 = sld [smem:[#allocation3 + %s31]]
        %v222 = vlaneseq
        %v223 = vshrl.u32 %v222, 7
        %v224 = vlaneseq
        %v225 = vand.u32 %v224, 127
        %s226 = smul.u32 %s32, 1024
        %v227 = vmul.u32 %v223, 128
        %v228 = vstv %s226
        %v229 = vadd.s32 %v228, %v227
        %v230 = vadd.s32 %v229, %v225
        %v231 = vld [vmem:[%s186] sm:$0xff]
        %v232 = vld [vmem:[%s195] sm:$0xff]
        %v233 = vstv %s221
        %vm234 = vcmp.lt.s32.totalorder %v230, %v233
        %v235 = vsel %vm234, %v231, 0.0
        %v236 = vsel %vm234, %v232, 0.0
        %v237 = vmul.f32 %v236, 1.5
        %v238 = vadd.f32 %v237, 1.0
        %v239 = vand.u32 2147483647, %v235
        %v240 = vsub.f32 0.0, %v239
        %v241 = vmul.f32 %v240, 1.442695
        %v242 = vpow.pop %v241
        %v243 = vadd.f32 %v242, 1.0
        %v244 = vlog2.pop %v243
        %v245 = vmul.f32 %v244, 0.6931472
        %v246 = vsub.f32 0.0, %v235
        %v247 = vmax.f32 %v246, 0.0
        %v248 = vadd.f32 %v245, %v247
        %v249 = vsub.f32 1.0, %v236
        %v250 = vmul.f32 %v249, %v235
        %v251 = vmul.f32 %v238, %v248
        %v252 = vadd.f32 %v250, %v251
        %vm253 = vcmp.lt.s32.totalorder %v230, 300
        %v254 = vsel %vm253, %v252, 0.0
        %v255 = vadd.f32 %v254, 0.0
        %256 = vst [vmem:[%s220] sm:$0xff] %v255
        %s257 = sand.u32 %s105, 1
        %s258 = scalar_lea.sflag [#allocation6], %s257
        %s259 = sand.u32 %s105, 1
        %s260 = smul.addr %s259, 8
        %s261 = scalar_lea.vmem [#allocation9], %s260
        // Predicated region
        $region37: #{tpu_custom_call.1} parent=27 // pred_check
          %p262 = pneg %p115
        $region38: #{tpu_custom_call.1} parent=27 // pred_check_branch
          %264 = sbr.rel (%p262) target = $region40
        $region39: #{tpu_custom_call.1} parent=27 // pred_region
          %s266 = ssub.s32 128, 128
          %267 = vsyncadd %s258, %s266
          %s268 = sadd.s32 %s32, %s31
          %s269 = smul.addr %s268, 128
          %s270 = scalar_lea.hbm %s3, %s269
          %s272 = sshll.u32 %s261, 4
          %s273 = int_to_ptr.vmem [resolvable:$true] %s272
          %275 = dma.vmem_to_hbm [thread:$0]  %s273, 128, %s270, %s258
        $region40: #{tpu_custom_call.1} parent=27 // pred_fallthru
          _
      $region28: #{tpu_custom_call.1} parent=5 // pred_fallthru
        _
      %p276 = scmp.le.s32.totalorder 2, %s22
      // Predicated region
      $region41: #{tpu_custom_call.1} parent=5 // pred_check
        %p277 = pneg %p276
      $region42: #{tpu_custom_call.1} parent=5 // pred_check_branch
        %279 = sbr.rel (%p277) target = $region44
      $region43: #{tpu_custom_call.1} parent=5 // pred_region
        %s280 = ssub.s32 %s22, 2
        // Predicated region
        $region45: #{tpu_custom_call.1} parent=43 // pred_check
          %p281 = pneg %p121
        $region46: #{tpu_custom_call.1} parent=43 // pred_check_branch
          %283 = sbr.rel (%p281) target = $region48
        $region47: #{tpu_custom_call.1} parent=43 // pred_region
          %s284 = sand.u32 %s106, 1
          %s285 = scalar_lea.sflag [#allocation6], %s284
          %s286 = sand.u32 %s106, 1
          %s287 = smul.addr %s286, 8
          %s288 = scalar_lea.vmem [#allocation9], %s287
          %289 = dma.done %s285, 128
        $region48: #{tpu_custom_call.1} parent=43 // pred_fallthru
          _
      $region44: #{tpu_custom_call.1} parent=5 // pred_fallthru
        _
    $region6: #{tpu_custom_call.1} parent=1 // loop_footer
      %s26 = sadd.s32 1, %s22
    $region7: #{tpu_custom_call.1} parent=1 // loop_footer_branch
      %21 = sbr.rel target = $region3
    $region8: #{tpu_custom_call.1} parent=1 // loop_exit
      _
    %290 = vsyncpa [#allocation5], 1
    %s291 = scalar_lea.sflag [#allocation5], 1
    %292 = vsyncpa %s291, 1
    %293 = vsyncpa [#allocation8], 1
    %s294 = scalar_lea.sflag [#allocation8], 1
    %295 = vsyncpa %s294, 1
    %296 = vsyncpa [#allocation6], 1
    %s297 = scalar_lea.sflag [#allocation6], 1
    %298 = vsyncpa %s297, 1

</llo_original>
